<compile_context>
chip_gen: v7x
topology: tpu7x:2x2x1
jax: 0.10.0
libtpu: 0.0.40
codegen_flags: <defaults>
</compile_context>

<pallas_src>
import math

import jax
import jax.numpy as jnp
from jax.experimental import pallas as pl
from jax.experimental.pallas import tpu as pltpu


def _round_up(x: int, m: int) -> int:
    return ((x + m - 1) // m) * m


def _pick_lane(n: int, c: int, max_lane: int = 1024):
    """Lane width L: multiple of both C and 128; prefer the largest L (<=1024)
    that keeps the (N, C) -> (N*C/L, L) reshape free (no batch padding)."""
    base = c * 128 // math.gcd(c, 128)            # lcm(c, 128)
    cands = [base]
    while cands[-1] * 2 <= max(base, max_lane):
        cands.append(cands[-1] * 2)
    for lane in reversed(cands):
        if (n * c) % lane == 0:
            return lane, False
    return base, True                              # batch needs padding to a multiple of base // c


def _make_kernel(rows: int, tile_rows: int, lane: int, c: int, ragged: bool):
    def kernel(x_ref, r_ref, e_ref, out_ref):
        i = pl.program_id(0)

        x = x_ref[...].astype(jnp.float32)                     # (tile_rows, lane)
        r = r_ref[...].astype(jnp.float32)                     # (tile_rows, G)

        # Expand each sample's rating across its C lanes on the idle MXU:
        # e[g, l] = 1.0 iff l // C == g  ->  rexp[row, l] = rating of the
        # sample owning lane l.
        rexp = jnp.dot(r, e_ref[...], preferred_element_type=jnp.float32)

        # Class index per lane (single sublane row, broadcast in the compare).
        col = (jax.lax.broadcasted_iota(jnp.int32, (1, lane), 1) % c).astype(jnp.float32)

        # BCE with torch's -100 log clamp; binary target -> select, not blend.
        log_x = jnp.maximum(jnp.log(x), -100.0)
        log_1mx = jnp.maximum(jnp.log(1.0 - x), -100.0)
        elem = -jnp.where(col <= rexp, log_x, log_1mx)

        if ragged:  # static: only emitted when rows % tile_rows != 0
            row = jax.lax.broadcasted_iota(jnp.int32, (tile_rows, 1), 0) + i * tile_rows
            elem = jnp.where(row < rows, elem, 0.0)

        # Per-tile partial sum, written to this tile's own lane-dense block.
        out_ref[...] = jnp.full((8, 128), jnp.sum(elem), dtype=jnp.float32)

    return kernel


def ordinal_xe_loss(input_ordinal_dist: jax.Array,
                    rating: jax.Array,
                    *,
                    block_rows: int | None = None,
                    target_block_bytes: int = 2 * 1024 * 1024) -> jax.Array:
    """Mean BCE between predicted ordinal distribution and class_encoding[rating]."""
    n, c = input_ordinal_dist.shape

    lane, need_pad = _pick_lane(n, c)
    group = lane // c                              # samples per lane-dense row
    n_batch = _round_up(n, group) if need_pad else n

    x_flat = input_ordinal_dist.reshape(-1)        # free row-major reshape, keeps dtype
    r_flat = rating.reshape(-1).astype(jnp.int32)
    if need_pad:
        # TODO(synk): rare path (batch not a multiple of lane // C): pad with
        # x=1.0 / rating=C-1 so padded elements contribute exactly 0 (one copy).
        x_flat = jnp.pad(x_flat, (0, (n_batch - n) * c), constant_values=1.0)
        r_flat = jnp.pad(r_flat, (0, n_batch - n), constant_values=c - 1)

    rows = n_batch // group
    x2 = x_flat.reshape(rows, lane)
    r2 = r_flat.reshape(rows, group)

    # Tiny constant expansion matrix for the in-kernel rating broadcast (MXU).
    expand = ((jnp.arange(lane, dtype=jnp.int32)[None, :] // c)
              == jnp.arange(group, dtype=jnp.int32)[:, None]).astype(jnp.float32)

    if block_rows is None:
        tr = max(8, (target_block_bytes // (lane * 4)) // 8 * 8)
    else:
        tr = max(8, (block_rows // 8) * 8)
    tile_rows = rows if rows <= tr else tr          # full-dim block or multiple of 8
    num_tiles = -(-rows // tile_rows)
    ragged = (rows % tile_rows) != 0

    out = pl.pallas_call(
        _make_kernel(rows, tile_rows, lane, c, ragged),
        out_shape=jax.ShapeDtypeStruct((num_tiles * 8, 128), jnp.float32),
        grid=(num_tiles,),
        in_specs=[
            pl.BlockSpec((tile_rows, lane), lambda i: (i, 0)),    # probabilities
            pl.BlockSpec((tile_rows, group), lambda i: (i, 0)),   # grouped ratings
            pl.BlockSpec((group, lane), lambda i: (0, 0)),        # expansion matrix (resident)
        ],
        out_specs=pl.BlockSpec((8, 128), lambda i: (i, 0)),
        compiler_params=pltpu.CompilerParams(
            dimension_semantics=("parallel",),
            vmem_limit_bytes=32 * 1024 * 1024,
        ),
    )(x2, r2, expand)

    partials = out.reshape(num_tiles, 8, 128)[:, 0, 0]
    return jnp.sum(partials) * (1.0 / float(n * c))


class OrdinalXELoss:
    """JAX/Pallas port of the PyTorch OrdinalXELoss module."""

    def __init__(self, num_classes: int, device=None):
        del device  # JAX arrays carry their own placement
        self.num_classes = num_classes
        # Tiny one-shot table, kept for API parity / reference use only
        # (the kernel fuses the ordinal encoding and never reads it).
        self.class_encoding = (
            jnp.arange(num_classes)[None, :] <= jnp.arange(num_classes)[:, None]
        ).astype(jnp.float32)

    def __call__(self, input_ordinal_dist: jax.Array, rating: jax.Array) -> jax.Array:
        return ordinal_xe_loss(input_ordinal_dist, rating)

    forward = __call__


def _reference_loss(class_encoding, probs, rating):
    tgt = class_encoding[rating]
    p = probs.astype(jnp.float32)
    log_p = jnp.maximum(jnp.log(p), -100.0)
    log_1mp = jnp.maximum(jnp.log(1.0 - p), -100.0)
    return -jnp.mean(tgt * log_p + (1.0 - tgt) * log_1mp)


if __name__ == "__main__":
    num_classes = 16
    module = OrdinalXELoss(num_classes)

    key = jax.random.PRNGKey(0)
    k1, k2, k3, k4, k5, k6 = jax.random.split(key, 6)

    # Test 1: small batch, single lane-dense tile.
    probs1 = jax.random.uniform(k1, (32, num_classes), jnp.float32, minval=0.02, maxval=0.98)
    rating1 = jax.random.randint(k2, (32,), 0, num_classes, dtype=jnp.int32)
    loss1 = jax.block_until_ready(module.forward(probs1, rating1))
    ref1 = _reference_loss(module.class_encoding, probs1, rating1)
    assert loss1.shape == ()
    assert jnp.allclose(loss1, ref1, rtol=1e-4, atol=1e-5), (loss1, ref1)

    # Test 2: multi-tile grid with a ragged last tile + parallel per-tile partials.
    probs2 = jax.random.uniform(k3, (1000, num_classes), jnp.float32, minval=0.02, maxval=0.98)
    rating2 = jax.random.randint(k4, (1000,), 0, num_classes, dtype=jnp.int32)
    loss2 = jax.block_until_ready(ordinal_xe_loss(probs2, rating2, block_rows=512))
    ref2 = _reference_loss(module.class_encoding, probs2, rating2)
    assert jnp.allclose(loss2, ref2, rtol=1e-4, atol=1e-5), (loss2, ref2)

    # Test 3: batch not a multiple of lane // C -> exercises the tiny pad path.
    probs3 = jax.random.uniform(k5, (30, num_classes), jnp.float32, minval=0.02, maxval=0.98)
    rating3 = jax.random.randint(k6, (30,), 0, num_classes, dtype=jnp.int32)
    loss3 = jax.block_until_ready(module(probs3, rating3))
    ref3 = _reference_loss(module.class_encoding, probs3, rating3)
    assert jnp.allclose(loss3, ref3, rtol=1e-4, atol=1e-5), (loss3, ref3)

    print("KERNEL_OK")
</pallas_src>

<mosaic_0001>
module attributes {stable_mosaic.version = 11 : i64} {
  func.func @kernel(%arg0: i32, %arg1: memref<1x512xf32, #tpu.memory_space<vmem>>, %arg2: memref<1x32xi32, #tpu.memory_space<vmem>>, %arg3: memref<32x512xf32, #tpu.memory_space<vmem>>, %arg4: memref<8x128xf32, #tpu.memory_space<vmem>>) attributes {dimension_semantics = [#tpu.dimension_semantics<parallel>], iteration_bounds = array<i64: 1>, scalar_prefetch = 0 : i64, scratch_operands = 0 : i64, tpu.core_type = #tpu.core_type<tc>, window_params = [{transform_indices = @transform_0, window_bounds = array<i64: 1, 512>}, {transform_indices = @transform_1, window_bounds = array<i64: 1, 32>}, {pipeline_mode = #tpu.pipeline_mode<synchronous>, transform_indices = @transform_2, window_bounds = array<i64: 32, 512>}, {transform_indices = @transform_3, window_bounds = array<i64: 8, 128>}]} {
    %c0 = arith.constant 0 : index
    %c0_0 = arith.constant 0 : index
    %0 = vector.load %arg1[%c0, %c0_0] : memref<1x512xf32, #tpu.memory_space<vmem>>, vector<1x512xf32>
    %c0_1 = arith.constant 0 : index
    %c0_2 = arith.constant 0 : index
    %1 = vector.load %arg2[%c0_1, %c0_2] : memref<1x32xi32, #tpu.memory_space<vmem>>, vector<1x32xi32>
    %2 = arith.sitofp %1 : vector<1x32xi32> to vector<1x32xf32>
    %c0_3 = arith.constant 0 : index
    %c0_4 = arith.constant 0 : index
    %3 = vector.load %arg3[%c0_3, %c0_4] : memref<32x512xf32, #tpu.memory_space<vmem>>, vector<32x512xf32>
    %cst = arith.constant dense<0.000000e+00> : vector<1x512xf32>
    %4 = tpu.matmul %2, %3, %cst {dimension_numbers = #tpu.dot_dimension_numbers<[1], [0], [0], [1], [0, 0, 1, 1], [], []>} : vector<1x32xf32>, vector<32x512xf32>, vector<1x512xf32> -> vector<1x512xf32>
    %5 = tpu.iota {dimensions = array<i32: 1>} : vector<1x512xi32>
    %c16_i32 = arith.constant 16 : i32
    %c0_i32 = arith.constant 0 : i32
    %6 = arith.cmpi eq, %c16_i32, %c0_i32 : i32
    %c1_i32 = arith.constant 1 : i32
    %7 = arith.select %6, %c1_i32, %c16_i32 : i32
    %8 = vector.broadcast %7 : i32 to vector<1x512xi32>
    %9 = arith.remsi %5, %8 : vector<1x512xi32>
    %c0_i32_5 = arith.constant 0 : i32
    %10 = vector.broadcast %c0_i32_5 : i32 to vector<1x512xi32>
    %11 = arith.cmpi ne, %9, %10 : vector<1x512xi32>
    %c0_i32_6 = arith.constant 0 : i32
    %12 = vector.broadcast %c0_i32_6 : i32 to vector<1x512xi32>
    %13 = arith.cmpi slt, %9, %12 : vector<1x512xi32>
    %c0_i32_7 = arith.constant 0 : i32
    %14 = arith.cmpi slt, %7, %c0_i32_7 : i32
    %15 = vector.broadcast %14 : i1 to vector<1x512xi1>
    %16 = vector.broadcast %15 : vector<1x512xi1> to vector<1x512xi1>
    %17 = arith.xori %13, %16 : vector<1x512xi1>
    %18 = arith.andi %17, %11 : vector<1x512xi1>
    %19 = vector.broadcast %7 : i32 to vector<1x512xi32>
    %20 = arith.addi %9, %19 : vector<1x512xi32>
    %21 = arith.select %18, %20, %9 : vector<1x512xi1>, vector<1x512xi32>
    %22 = arith.sitofp %21 : vector<1x512xi32> to vector<1x512xf32>
    %23 = math.log %0 : vector<1x512xf32>
    %cst_8 = arith.constant -1.000000e+02 : f32
    %24 = vector.broadcast %cst_8 : f32 to vector<1x512xf32>
    %25 = arith.maximumf %23, %24 : vector<1x512xf32>
    %cst_9 = arith.constant 1.000000e+00 : f32
    %26 = vector.broadcast %cst_9 : f32 to vector<1x512xf32>
    %27 = arith.subf %26, %0 : vector<1x512xf32>
    %28 = math.log %27 : vector<1x512xf32>
    %cst_10 = arith.constant -1.000000e+02 : f32
    %29 = vector.broadcast %cst_10 : f32 to vector<1x512xf32>
    %30 = arith.maximumf %28, %29 : vector<1x512xf32>
    %31 = arith.cmpf ole, %22, %4 : vector<1x512xf32>
    %32 = arith.select %31, %25, %30 : vector<1x512xi1>, vector<1x512xf32>
    %cst_11 = arith.constant 0.000000e+00 : f32
    %33 = vector.broadcast %cst_11 : f32 to vector<1x512xf32>
    %34 = arith.subf %33, %32 : vector<1x512xf32>
    %35 = vector.shape_cast %34 : vector<1x512xf32> to vector<1x1x512xf32>
    %cst_12 = arith.constant dense<0.000000e+00> : vector<1xf32>
    %36 = vector.multi_reduction <add>, %35, %cst_12 [1, 2] : vector<1x1x512xf32> to vector<1xf32>
    %37 = vector.shape_cast %36 : vector<1xf32> to vector<1x1x1xf32>
    %38 = vector.extract %37[0, 0, 0] : f32 from vector<1x1x1xf32>
    %39 = vector.broadcast %38 : f32 to vector<8x128xf32>
    %c0_13 = arith.constant 0 : index
    %c0_14 = arith.constant 0 : index
    %40 = vector.load %arg4[%c0_13, %c0_14] : memref<8x128xf32, #tpu.memory_space<vmem>>, vector<8x128xf32>
    tpu.vector_store %arg4[%c0_13, %c0_14], %39 {strides = array<i32>} : memref<8x128xf32, #tpu.memory_space<vmem>>, vector<8x128xf32>,
    return
  }
  func.func @transform_0(%arg0: i32) -> (i32, i32) {
    %c0_i32 = arith.constant 0 : i32
    %c0_i32_0 = arith.constant 0 : i32
    return %arg0, %c0_i32 : i32, i32
  }
  func.func @transform_1(%arg0: i32) -> (i32, i32) {
    %c0_i32 = arith.constant 0 : i32
    %c0_i32_0 = arith.constant 0 : i32
    return %arg0, %c0_i32 : i32, i32
  }
  func.func @transform_2(%arg0: i32) -> (i32, i32) {
    %c0_i32 = arith.constant 0 : i32
    %c0_i32_0 = arith.constant 0 : i32
    %c0_i32_1 = arith.constant 0 : i32
    return %c0_i32, %c0_i32_0 : i32, i32
  }
  func.func @transform_3(%arg0: i32) -> (i32, i32) {
    %c0_i32 = arith.constant 0 : i32
    %c0_i32_0 = arith.constant 0 : i32
    return %arg0, %c0_i32 : i32, i32
  }
}

</mosaic_0001>

<llo_original>
// kernel: tpu_custom_call.1
$region0: #{tpu_custom_call.1}
  #allocation0 [shape = 'u32[]', space=smem, size = 0x4, offset = 0x4, fixed_abs, tag = 'smem constant byte address 0x4 - core index']
  #allocation1 [shape = 'u32[144,128]{1,0:T(1,128)}', space=vmem, size = 0x12000, scoped, tag = 'internal scratch']
  %s0 = inlined_call_operand.hbm [shape: f32[1,512], index: 0, kind: input, shape index: {}]
  %s1 = inlined_call_operand.vmem [shape: s32[1,32], index: 1, kind: input, shape index: {}]
  %s2 = inlined_call_operand.hbm [shape: f32[32,512], index: 2, kind: input, shape index: {}]
  %s3 = inlined_call_operand.hbm [shape: f32[8,128], index: 3, kind: output, shape index: {}]
  %s4 = sld [smem:[#allocation0]]
  $region30: #{tpu_custom_call.1} parent=0
    _
  %s6 = ssub.s32 1, %s4
  %s7 = scalar_select 0, %s6, %s4
  $region1: #{tpu_custom_call.1} parent=0
    #allocation2 [shape = 'u8[2048]{0}', space=vmem, size = 0x800, scoped, tag = 'input window, operand 0, single buffered']
    #allocation3 [shape = 's32[1]{0}', space=sflag, size = 0x4, scoped, tag = 'scoped memory for tpu_custom_call.1']
    #allocation4 [shape = 's32[1]{0}', space=sflag, size = 0x4, scoped, tag = 'scoped memory for tpu_custom_call.1']
    #allocation5 [shape = 'u8[65536]{0}', space=vmem, size = 0x10000, scoped, tag = 'input window, operand 2, single buffered']
    #allocation6 [shape = 's32[1]{0}', space=sflag, size = 0x4, scoped, tag = 'scoped memory for tpu_custom_call.1']
    #allocation7 [shape = 'u8[4096]{0}', space=vmem, size = 0x1000, scoped, tag = 'output window, operand 0, single buffered']
    %8 = vsyncpa [#allocation3], 0
    %9 = vsyncpa [#allocation6], 0
    %10 = vsyncpa [#allocation4], 0
    // Predicated region
    $region2: #{tpu_custom_call.1} parent=1 // pred_check
      _
    $region3: #{tpu_custom_call.1} parent=1 // pred_check_branch
      %12 = sbr.rel (0) target = $region5
    $region4: #{tpu_custom_call.1} parent=1 // pred_region
      %s14 = ssub.s32 64, 64
      %15 = vsyncadd [#allocation3], %s14
      %s17 = sshll.u32 [#allocation2], 4
      %s18 = int_to_ptr.vmem [resolvable:$true] %s17
      %20 = dma.hbm_to_vmem [thread:$0]  %s0, 64, %s18, [#allocation3]
    $region5: #{tpu_custom_call.1} parent=1 // pred_fallthru
      _
    // Predicated region
    $region6: #{tpu_custom_call.1} parent=1 // pred_check
      _
    $region7: #{tpu_custom_call.1} parent=1 // pred_check_branch
      %22 = sbr.rel (0) target = $region9
    $region8: #{tpu_custom_call.1} parent=1 // pred_region
      _
    $region9: #{tpu_custom_call.1} parent=1 // pred_fallthru
      _
    // Predicated region
    $region10: #{tpu_custom_call.1} parent=1 // pred_check
      _
    $region11: #{tpu_custom_call.1} parent=1 // pred_check_branch
      %24 = sbr.rel (0) target = $region13
    $region12: #{tpu_custom_call.1} parent=1 // pred_region
      %s26 = ssub.s32 2048, 2048
      %27 = vsyncadd [#allocation6], %s26
      %s28 = sshll.u32 [#allocation5], 4
      %s29 = int_to_ptr.vmem [resolvable:$true] %s28
      %34 = dma.hbm_to_vmem [thread:$0]  %s2, 2048, %s29, [#allocation6], 512, 512, 32
    $region13: #{tpu_custom_call.1} parent=1 // pred_fallthru
      _
    // Predicated region
    $region14: #{tpu_custom_call.1} parent=1 // pred_check
      _
    $region15: #{tpu_custom_call.1} parent=1 // pred_check_branch
      %36 = sbr.rel (0) target = $region17
    $region16: #{tpu_custom_call.1} parent=1 // pred_region
      %37 = dma.done [#allocation3], 64
    $region17: #{tpu_custom_call.1} parent=1 // pred_fallthru
      _
    // Predicated region
    $region18: #{tpu_custom_call.1} parent=1 // pred_check
      _
    $region19: #{tpu_custom_call.1} parent=1 // pred_check_branch
      %39 = sbr.rel (0) target = $region21
    $region20: #{tpu_custom_call.1} parent=1 // pred_region
      %40 = dma.done [#allocation6], 2048
    $region21: #{tpu_custom_call.1} parent=1 // pred_fallthru
      _
    %v41 = vld [vmem:[#allocation2] sm:$0xf]
    %v42 = vld [vmem:[%s1] sm:$0x1]
    %v43 = vcvt.s32.f32 %v42
    %v44 = vld [vmem:[#allocation5] sm:$0xff]
    %v45 = vld [vmem:[#allocation5 + $0x8] sm:$0xff]
    %v46 = vld [vmem:[#allocation5 + $0x10] sm:$0xff]
    %v47 = vld [vmem:[#allocation5 + $0x18] sm:$0xff]
    %v48 = vld [vmem:[#allocation5 + $0x20] sm:$0xff]
    %v49 = vld [vmem:[#allocation5 + $0x28] sm:$0xff]
    %v50 = vld [vmem:[#allocation5 + $0x30] sm:$0xff]
    %v51 = vld [vmem:[#allocation5 + $0x38] sm:$0xff]
    %v52 = vld [vmem:[#allocation5 + $0x40] sm:$0xff]
    %v53 = vld [vmem:[#allocation5 + $0x48] sm:$0xff]
    %v54 = vld [vmem:[#allocation5 + $0x50] sm:$0xff]
    %v55 = vld [vmem:[#allocation5 + $0x58] sm:$0xff]
    %v56 = vld [vmem:[#allocation5 + $0x60] sm:$0xff]
    %v57 = vld [vmem:[#allocation5 + $0x68] sm:$0xff]
    %v58 = vld [vmem:[#allocation5 + $0x70] sm:$0xff]
    %v59 = vld [vmem:[#allocation5 + $0x78] sm:$0xff]
    %vm60 = vcmask 261120
    %v62 = vsel %vm60, %v43, 0
    %64 = vmatprep.subr.mxu0 %v45
    %65 = vmatpush1.msra.mxu0 %v44
    %66 = vmatprep.subr.mxu0 %v49
    %67 = vmatpush1.msra.mxu0 %v48
    %68 = vmatprep.subr.mxu0 %v53
    %69 = vmatpush1.msra.mxu0 %v52
    %70 = vmatprep.subr.mxu0 %v57
    %71 = vmatpush1.msra.mxu0 %v56
    %72 = vmatprep.subr.mxu0 0.0
    %73 = vmatpush1.msra.mxu0 0.0
    %74 = vmatprep.subr.mxu0 0.0
    %75 = vmatpush1.msra.mxu0 0.0
    %76 = vmatprep.subr.mxu0 0.0
    %77 = vmatpush1.msra.mxu0 0.0
    %78 = vmatprep.subr.mxu0 0.0
    %79 = vmatpush1.msra.mxu0 0.0
    %80 = vmatprep.subr.mxu0 0.0
    %81 = vmatpush1.msra.mxu0 0.0
    %82 = vmatprep.subr.mxu0 0.0
    %83 = vmatpush1.msra.mxu0 0.0
    %84 = vmatprep.subr.mxu0 0.0
    %85 = vmatpush1.msra.mxu0 0.0
    %86 = vmatprep.subr.mxu0 0.0
    %87 = vmatpush1.msra.mxu0 0.0
    %88 = vmatprep.subr.mxu0 0.0
    %89 = vmatpush1.msra.mxu0 0.0
    %90 = vmatprep.subr.mxu0 0.0
    %91 = vmatpush1.msra.mxu0 0.0
    %92 = vmatprep.subr.mxu0 0.0
    %93 = vmatpush1.msra.mxu0 0.0
    %94 = vmatprep.subr.mxu0 0.0
    %95 = vmatpush1.msra.mxu0 0.0
    %96 = vmatprep.subr.mxu0 0.0
    %97 = vmatpush1.msra.mxu0 0.0
    %98 = vmatprep.subr.mxu0 0.0
    %99 = vmatpush1.msra.mxu0 0.0
    %100 = vmatprep.subr.mxu0 0.0
    %101 = vmatpush1.msra.mxu0 0.0
    %102 = vmatprep.subr.mxu0 0.0
    %103 = vmatpush1.msra.mxu0 0.0
    %104 = vmatprep.subr.mxu0 0.0
    %105 = vmatpush1.msra.mxu0 0.0
    %106 = vmatprep.subr.mxu0 0.0
    %107 = vmatpush1.msra.mxu0 0.0
    %108 = vmatprep.subr.mxu0 0.0
    %109 = vmatpush1.msra.mxu0 0.0
    %110 = vmatprep.subr.mxu0 0.0
    %111 = vmatpush1.msra.mxu0 0.0
    %112 = vmatprep.subr.mxu0 0.0
    %113 = vmatpush1.msra.mxu0 0.0
    %114 = vmatprep.subr.mxu0 0.0
    %115 = vmatpush1.msra.mxu0 0.0
    %116 = vmatprep.subr.mxu0 0.0
    %117 = vmatpush1.msra.mxu0 0.0
    %118 = vmatprep.subr.mxu0 0.0
    %119 = vmatpush1.msra.mxu0 0.0
    %120 = vmatprep.subr.mxu0 0.0
    %121 = vmatpush1.msra.mxu0 0.0
    %122 = vmatprep.subr.mxu0 0.0
    %123 = vmatpush1.msra.mxu0 0.0
    %124 = vmatprep.subr.mxu0 0.0
    %125 = vmatpush1.msra.mxu0 0.0
    %126 = vmatprep.subr.mxu0 0.0
    %127 = vmatpush1.msra.mxu0 0.0
    %128 = vmatprep.mubr.f32.mxu0 0.0
    %129 = vmatmul.mubr.f32.gmra.mrb[0].mxu0 %v62
    %v130 = vpop.f32.mrb[0].mxu0
    %v131 = vadd.f32 0.0, %v130
    %v132 = vpop.f32.mrb[0].mxu0
    %v133 = vadd.f32 0.0, %v132
    %134 = vdwg.mxu0
    %135 = vmatprep.subr.mxu0 %v47
    %136 = vmatpush1.msra.mxu0 %v46
    %137 = vmatprep.subr.mxu0 %v51
    %138 = vmatpush1.msra.mxu0 %v50
    %139 = vmatprep.subr.mxu0 %v55
    %140 = vmatpush1.msra.mxu0 %v54
    %141 = vmatprep.subr.mxu0 %v59
    %142 = vmatpush1.msra.mxu0 %v58
    %143 = vmatprep.subr.mxu0 0.0
    %144 = vmatpush1.msra.mxu0 0.0
    %145 = vmatprep.subr.mxu0 0.0
    %146 = vmatpush1.msra.mxu0 0.0
    %147 = vmatprep.subr.mxu0 0.0
    %148 = vmatpush1.msra.mxu0 0.0
    %149 = vmatprep.subr.mxu0 0.0
    %150 = vmatpush1.msra.mxu0 0.0
    %151 = vmatprep.subr.mxu0 0.0
    %152 = vmatpush1.msra.mxu0 0.0
    %153 = vmatprep.subr.mxu0 0.0
    %154 = vmatpush1.msra.mxu0 0.0
    %155 = vmatprep.subr.mxu0 0.0
    %156 = vmatpush1.msra.mxu0 0.0
    %157 = vmatprep.subr.mxu0 0.0
    %158 = vmatpush1.msra.mxu0 0.0
    %159 = vmatprep.subr.mxu0 0.0
    %160 = vmatpush1.msra.mxu0 0.0
    %161 = vmatprep.subr.mxu0 0.0
    %162 = vmatpush1.msra.mxu0 0.0
    %163 = vmatprep.subr.mxu0 0.0
    %164 = vmatpush1.msra.mxu0 0.0
    %165 = vmatprep.subr.mxu0 0.0
    %166 = vmatpush1.msra.mxu0 0.0
    %167 = vmatprep.subr.mxu0 0.0
    %168 = vmatpush1.msra.mxu0 0.0
    %169 = vmatprep.subr.mxu0 0.0
    %170 = vmatpush1.msra.mxu0 0.0
    %171 = vmatprep.subr.mxu0 0.0
    %172 = vmatpush1.msra.mxu0 0.0
    %173 = vmatprep.subr.mxu0 0.0
    %174 = vmatpush1.msra.mxu0 0.0
    %175 = vmatprep.subr.mxu0 0.0
    %176 = vmatpush1.msra.mxu0 0.0
    %177 = vmatprep.subr.mxu0 0.0
    %178 = vmatpush1.msra.mxu0 0.0
    %179 = vmatprep.subr.mxu0 0.0
    %180 = vmatpush1.msra.mxu0 0.0
    %181 = vmatprep.subr.mxu0 0.0
    %182 = vmatpush1.msra.mxu0 0.0
    %183 = vmatprep.subr.mxu0 0.0
    %184 = vmatpush1.msra.mxu0 0.0
    %185 = vmatprep.subr.mxu0 0.0
    %186 = vmatpush1.msra.mxu0 0.0
    %187 = vmatprep.subr.mxu0 0.0
    %188 = vmatpush1.msra.mxu0 0.0
    %189 = vmatprep.subr.mxu0 0.0
    %190 = vmatpush1.msra.mxu0 0.0
    %191 = vmatprep.subr.mxu0 0.0
    %192 = vmatpush1.msra.mxu0 0.0
    %193 = vmatprep.subr.mxu0 0.0
    %194 = vmatpush1.msra.mxu0 0.0
    %195 = vmatprep.subr.mxu0 0.0
    %196 = vmatpush1.msra.mxu0 0.0
    %197 = vmatprep.subr.mxu0 0.0
    %198 = vmatpush1.msra.mxu0 0.0
    %199 = vmatprep.mubr.f32.mxu0 0.0
    %200 = vmatmul.mubr.f32.gmra.mrb[0].mxu0 %v62
    %v201 = vpop.f32.mrb[0].mxu0
    %v202 = vadd.f32 0.0, %v201
    %v203 = vpop.f32.mrb[0].mxu0
    %v204 = vadd.f32 0.0, %v203
    %205 = vdwg.mxu0
    %v206 = vlaneseq
    %v207 = vand.u32 %v206, 127
    %v208 = vadd.s32 %v207, 128
    %v209 = vadd.s32 %v207, 256
    %v210 = vadd.s32 %v207, 384
    %vm211 = vcmp.lt.s32.totalorder %v207, 0
    %v212 = vsub.s32 0, %v207
    %v213 = vsel %vm211, %v212, %v207
    %v214 = vshrl.u32 %v213, 4
    %v215 = vand.u32 %v213, 15
    %v216 = vsub.s32 0, %v215
    %v217 = vsel %vm211, %v216, %v215
    %vm218 = vcmp.lt.s32.totalorder %v208, 0
    %v219 = vsub.s32 0, %v208
    %v220 = vsel %vm218, %v219, %v208
    %v221 = vshrl.u32 %v220, 4
    %v222 = vand.u32 %v220, 15
    %v223 = vsub.s32 0, %v222
    %v224 = vsel %vm218, %v223, %v222
    %vm225 = vcmp.lt.s32.totalorder %v209, 0
    %v226 = vsub.s32 0, %v209
    %v227 = vsel %vm225, %v226, %v209
    %v228 = vshrl.u32 %v227, 4
    %v229 = vand.u32 %v227, 15
    %v230 = vsub.s32 0, %v229
    %v231 = vsel %vm225, %v230, %v229
    %vm232 = vcmp.lt.s32.totalorder %v210, 0
    %v233 = vsub.s32 0, %v210
    %v234 = vsel %vm232, %v233, %v210
    %v235 = vshrl.u32 %v234, 4
    %v236 = vand.u32 %v234, 15
    %v237 = vsub.s32 0, %v236
    %v238 = vsel %vm232, %v237, %v236
    %vm239 = vcmp.ne.s32.totalorder %v217, 0
    %vm240 = vcmp.ne.s32.totalorder %v224, 0
    %vm241 = vcmp.ne.s32.totalorder %v231, 0
    %vm242 = vcmp.ne.s32.totalorder %v238, 0
    %vm243 = vcmp.lt.s32.totalorder %v217, 0
    %vm244 = vcmp.lt.s32.totalorder %v224, 0
    %vm245 = vcmp.lt.s32.totalorder %v231, 0
    %vm246 = vcmp.lt.s32.totalorder %v238, 0
    %vm247 = vmand %vm243, %vm239
    %vm248 = vmand %vm244, %vm240
    %vm249 = vmand %vm245, %vm241
    %vm250 = vmand %vm246, %vm242
    %v251 = vadd.s32 %v217, 16
    %v252 = vadd.s32 %v224, 16
    %v253 = vadd.s32 %v231, 16
    %v254 = vadd.s32 %v238, 16
    %v255 = vsel %vm247, %v251, %v217
    %v256 = vsel %vm248, %v252, %v224
    %v257 = vsel %vm249, %v253, %v231
    %v258 = vsel %vm250, %v254, %v238
    %v259 = vcvt.s32.f32 %v255
    %v260 = vcvt.s32.f32 %v256
    %v261 = vcvt.s32.f32 %v257
    %v262 = vcvt.s32.f32 %v258
    %v263 = vlog2.pop %v41
    %v264 = vmul.f32 %v263, 0.6931472
    %v265 = vmax.f32 %v264, -100.0
    %v266 = vsub.f32 1.0, %v41
    %v267 = vlog2.pop %v266
    %v268 = vmul.f32 %v267, 0.6931472
    %v269 = vmax.f32 %v268, -100.0
    %vm270 = vcmp.le.f32.partialorder %v259, %v131
    %vm271 = vcmp.le.f32.partialorder %v260, %v133
    %vm272 = vcmp.le.f32.partialorder %v261, %v202
    %vm273 = vcmp.le.f32.partialorder %v262, %v204
    %v275 = vlaneseq
    %v276 = vshrl.u32 %v275, 7
    %v277 = vsub.s32 0, %v276
    %v278 = vrot.slane %v265, %v277
    %v279 = vlaneseq
    %v280 = vshrl.u32 %v279, 7
    %v281 = vsub.s32 1, %v280
    %v282 = vrot.slane %v265, %v281
    %v283 = vlaneseq
    %v284 = vshrl.u32 %v283, 7
    %v285 = vsub.s32 2, %v284
    %v286 = vrot.slane %v265, %v285
    %v287 = vlaneseq
    %v288 = vshrl.u32 %v287, 7
    %v289 = vsub.s32 3, %v288
    %v290 = vrot.slane %v265, %v289
    %v296 = vlaneseq
    %v297 = vshrl.u32 %v296, 7
    %v298 = vsub.s32 0, %v297
    %v299 = vrot.slane %v269, %v298
    %v300 = vlaneseq
    %v301 = vshrl.u32 %v300, 7
    %v302 = vsub.s32 1, %v301
    %v303 = vrot.slane %v269, %v302
    %v304 = vlaneseq
    %v305 = vshrl.u32 %v304, 7
    %v306 = vsub.s32 2, %v305
    %v307 = vrot.slane %v269, %v306
    %v308 = vlaneseq
    %v309 = vshrl.u32 %v308, 7
    %v310 = vsub.s32 3, %v309
    %v311 = vrot.slane %v269, %v310
    %v316 = vsel %vm270, %v278, %v299
    %v317 = vsel %vm271, %v282, %v303
    %v318 = vsel %vm272, %v286, %v307
    %v319 = vsel %vm273, %v290, %v311
    %v320 = vsub.f32 0.0, %v316
    %v321 = vsub.f32 0.0, %v317
    %v322 = vsub.f32 0.0, %v318
    %v323 = vsub.f32 0.0, %v319
    %vm324 = vcmask 1040384
    %v325 = vsel %vm324, %v320, 0.0
    %v326 = vsel %vm324, %v321, 0.0
    %v327 = vadd.f32 %v325, %v326
    %v328 = vsel %vm324, %v322, 0.0
    %v329 = vadd.f32 %v327, %v328
    %v330 = vsel %vm324, %v323, 0.0
    %v331 = vadd.f32 %v329, %v330
    %332 = vadd.xlane.f32.xlu0 %v331
    %v333 = vpop.xlane.xlu0 %332
    %v334 = vrot.slane %v333, 4
    %v335 = vadd.f32 %v333, %v334
    %v336 = vrot.slane %v335, 2
    %v337 = vadd.f32 %v335, %v336
    %v338 = vrot.slane %v337, 1
    %v339 = vadd.f32 %v337, %v338
    %s340 = vtos %v339
    %v341 = vstv %s340
    %342 = vst [vmem:[#allocation7] sm:$0xff] %v341
    // Predicated region
    $region22: #{tpu_custom_call.1} parent=1 // pred_check
      _
    $region23: #{tpu_custom_call.1} parent=1 // pred_check_branch
      %344 = sbr.rel (0) target = $region25
    $region24: #{tpu_custom_call.1} parent=1 // pred_region
      %s346 = ssub.s32 128, 128
      %347 = vsyncadd [#allocation4], %s346
      %s349 = sshll.u32 [#allocation7], 4
      %s350 = int_to_ptr.vmem [resolvable:$true] %s349
      %352 = dma.vmem_to_hbm [thread:$0]  %s350, 128, %s3, [#allocation4]
    $region25: #{tpu_custom_call.1} parent=1 // pred_fallthru
      _
    // Predicated region
    $region26: #{tpu_custom_call.1} parent=1 // pred_check
      _
    $region27: #{tpu_custom_call.1} parent=1 // pred_check_branch
      %354 = sbr.rel (0) target = $region29
    $region28: #{tpu_custom_call.1} parent=1 // pred_region
      %355 = dma.done [#allocation4], 128
    $region29: #{tpu_custom_call.1} parent=1 // pred_fallthru
      _
    %356 = vsyncpa [#allocation3], 1
    %357 = vsyncpa [#allocation6], 1
    %358 = vsyncpa [#allocation4], 1

</llo_original>
